<compile_context>
chip_gen: v7x
topology: tpu7x:2x2x1
jax: 0.10.0
libtpu: 0.0.40
codegen_flags: <defaults>
</compile_context>

<pallas_src>
import functools

import jax
import jax.numpy as jnp
from jax import lax
from jax.experimental import pallas as pl
from jax.experimental.pallas import tpu as pltpu


def _round_up(x, m):
    return ((x + m - 1) // m) * m


def _few_shot_kernel(trep_ref, reps_ref, segw_ref, onehot_ref, tgt_ref,
                     out_ref, *, num_tags):
    # trep_ref  : (BB, 1, Dp)    native dtype (pre-pooled test rep, D zero-padded)
    # reps_ref  : (BB, S*L, Dp)  native dtype (support token reps, D zero-padded)
    # segw_ref  : (BB, S*L, S)   f32, block-diagonal segment matrix with the
    #                            length-normalized support mask folded in
    # onehot_ref: (BB, S, NTP)   f32, one-hot labels / max(class_count, 1)
    # tgt_ref   : (BB, 1, NTP)   f32, one-hot of relu(test_target - 1)
    # out_ref   : (BB, 1, NTP)   f32; lanes [0, NT) = emission, lane NT = loss
    bb, _, ntp = out_ref.shape

    # token-level similarities on the MXU (f32 accumulation, bf16 passthrough)
    u = jnp.einsum('bqd,bnd->bqn', trep_ref[...], reps_ref[...],
                   preferred_element_type=jnp.float32)            # (BB, 1, S*L)
    # segment-sum over support_len (mask / max(len,1) already folded in)
    sims = jnp.einsum('bqn,bns->bqs', u, segw_ref[...],
                      preferred_element_type=jnp.float32)         # (BB, 1, S)
    # prototype emission (1 / max(class_count,1) already folded in)
    emission = jnp.einsum('bqs,bst->bqt', sims, onehot_ref[...],
                          preferred_element_type=jnp.float32)     # (BB, 1, NTP)

    # decoder: single-label cross entropy over the valid NT lanes
    lane = lax.broadcasted_iota(jnp.int32, (bb, 1, ntp), 2)
    logits = jnp.where(lane < num_tags, emission, -jnp.inf)
    m = jnp.max(logits, axis=-1, keepdims=True)
    lse = m + jnp.log(jnp.sum(jnp.exp(logits - m), axis=-1, keepdims=True))
    tgt_logit = jnp.sum(emission * tgt_ref[...], axis=-1, keepdims=True)
    loss_pe = jnp.broadcast_to(lse - tgt_logit, (bb, 1, ntp))

    # pack the per-example loss into the spare padded lane (one output DMA)
    out_ref[...] = jnp.where(lane == num_tags, loss_pe, emission)


def few_shot_text_classifier(test_reps, test_output_mask, support_reps,
                             support_output_mask, test_target, support_target,
                             label_mask=None):
    """Returns (loss, emission) mirroring cal_emission(...) + forward(...)."""
    # label_mask is unused in the reference forward pass; cal_emission replaces
    # test_output_mask with all-ones and the single-label decoder ignores it.
    B, T, D = test_reps.shape
    _, S, L, _ = support_reps.shape
    NT = support_target.shape[-1]
    Dp = _round_up(D, 128)            # lane-dense contraction dim
    NTP = _round_up(NT + 1, 128)      # lane-dense emission + 1 spare loss lane

    rdt = support_reps.dtype

    # host precompute: pooled test rep (ones mask -> plain mean over T)
    t_rep = jnp.mean(test_reps.astype(jnp.float32), axis=1,
                     keepdims=True).astype(rdt)                       # (B,1,D)

    # host precompute: fold 1/max(len,1) mask into a block-diag segment matrix
    sup_mask = support_output_mask.astype(jnp.float32)                # (B,S,L)
    lens = jnp.maximum(jnp.sum(sup_mask, axis=2, keepdims=True), 1.0)
    norm_mask = (sup_mask / lens).reshape(B, S * L)                   # (B,S*L)
    seg = (jnp.arange(S * L)[:, None] // L
           == jnp.arange(S)[None, :]).astype(jnp.float32)            # (S*L,S)
    segw = norm_mask[:, :, None] * seg[None]                          # (B,S*L,S)

    # host precompute: fold 1/max(class_count,1) into one-hot labels, pad NT
    onehot = support_target[:, :, 0, :].astype(jnp.float32)           # (B,S,NT)
    cls_cnt = jnp.maximum(jnp.sum(onehot, axis=1, keepdims=True), 1.0)
    w_onehot = jnp.pad(onehot / cls_cnt,
                       ((0, 0), (0, 0), (0, NTP - NT)))               # (B,S,NTP)

    # host precompute: target one-hot for the gathered logit
    tags = jnp.maximum(test_target[:, 0].astype(jnp.int32) - 1, 0)    # (B,)
    tgt_onehot = jax.nn.one_hot(tags, NTP,
                                dtype=jnp.float32)[:, None, :]        # (B,1,NTP)

    # native-dtype passthrough of the support reps, lane-dense last dim
    reps_flat = support_reps.reshape(B, S * L, D)
    if Dp > D:
        reps_flat = jnp.pad(reps_flat, ((0, 0), (0, 0), (0, Dp - D)))
        t_rep = jnp.pad(t_rep, ((0, 0), (0, 0), (0, Dp - D)))

    # --- batch-block size selection (VMEM budget, megacore-friendly grid) ----
    itemsize = jnp.dtype(rdt).itemsize
    per_b = (S * L * Dp * itemsize   # support reps
             + Dp * itemsize         # pooled test rep
             + S * L * S * 4         # segment matrix
             + S * NTP * 4           # one-hot labels
             + NTP * 4               # target one-hot
             + NTP * 4)              # output
    budget = (16 << 20) // 2         # ~16 MiB of tiles, double-buffered ->
                                     # safe vs v5e/v6e/v7x scoped VMEM limits
    bb_budget = max(1, budget // per_b)
    bb_cap = max(1, B // 2)          # keep >= 2 grid steps for v7x megacore
    bb = 1
    for cand in range(1, min(bb_budget, bb_cap, B) + 1):
        if B % cand == 0:            # exact tiling, no ragged last block
            bb = cand
    grid = (B // bb,)

    cost = pl.CostEstimate(
        flops=2 * B * (S * L * Dp + S * L * S + S * NTP),
        transcendentals=B * NTP,
        bytes_accessed=B * per_b)

    kernel = functools.partial(_few_shot_kernel, num_tags=NT)

    out = pl.pallas_call(
        kernel,
        grid_spec=pltpu.PrefetchScalarGridSpec(
            num_scalar_prefetch=0,
            grid=grid,
            in_specs=[
                pl.BlockSpec((bb, 1, Dp), lambda b: (b, 0, 0)),
                pl.BlockSpec((bb, S * L, Dp), lambda b: (b, 0, 0)),
                pl.BlockSpec((bb, S * L, S), lambda b: (b, 0, 0)),
                pl.BlockSpec((bb, S, NTP), lambda b: (b, 0, 0)),
                pl.BlockSpec((bb, 1, NTP), lambda b: (b, 0, 0)),
            ],
            out_specs=pl.BlockSpec((bb, 1, NTP), lambda b: (b, 0, 0)),
        ),
        out_shape=jax.ShapeDtypeStruct((B, 1, NTP), jnp.float32),
        compiler_params=pltpu.CompilerParams(
            dimension_semantics=("parallel",),
            vmem_limit_bytes=32 << 20),
        cost_estimate=cost,
    )(t_rep, reps_flat, segw, w_onehot, tgt_onehot)

    emission = out[:, 0, :NT]
    loss = jnp.mean(out[:, 0, NT])
    return loss, emission


def _reference(test_reps, support_reps, support_output_mask, support_target,
               test_target):
    """Pure-JAX reference for correctness checking."""
    test_reps = test_reps.astype(jnp.float32)
    support_reps = support_reps.astype(jnp.float32)
    sup_mask = support_output_mask.astype(jnp.float32)
    onehot = support_target[:, :, 0, :].astype(jnp.float32)
    masked = support_reps * sup_mask[..., None]
    s_rep = masked.sum(2) / jnp.maximum(sup_mask.sum(2)[..., None], 1.0)
    proto = jnp.einsum('bst,bsd->btd', onehot, s_rep)
    proto = proto / jnp.maximum(onehot.sum(1)[..., None], 1.0)
    t_rep = test_reps.mean(1)
    emission = jnp.einsum('bd,btd->bt', t_rep, proto)
    tags = jnp.maximum(test_target[:, 0].astype(jnp.int32) - 1, 0)
    lse = jax.nn.logsumexp(emission, axis=-1)
    tgt = jnp.take_along_axis(emission, tags[:, None], axis=-1)[:, 0]
    loss = jnp.mean(lse - tgt)
    return loss, emission


if __name__ == "__main__":
    B, T, S, L, D, NT = 2, 8, 4, 8, 32, 8  # batch, test_len, support_size,
                                           # support_len, emb_dim, num_tags
    key = jax.random.PRNGKey(0)
    k1, k2, k3, k4, k5 = jax.random.split(key, 5)

    test_reps = jax.random.normal(k1, (B, T, D), jnp.float32)
    support_reps = jax.random.normal(k2, (B, S, L, D), jnp.float32)
    test_output_mask = jnp.ones((B, T), jnp.float32)
    sup_lens = jax.random.randint(k3, (B, S), 3, L + 1)
    support_output_mask = (jnp.arange(L)[None, None, :]
                           < sup_lens[..., None]).astype(jnp.float32)
    sup_labels = jax.random.randint(k4, (B, S), 0, NT)
    support_target = jax.nn.one_hot(sup_labels, NT,
                                    dtype=jnp.float32)[:, :, None, :]  # (B,S,1,NT)
    # index targets in [1, NT] so that relu(target - 1) lands in [0, NT-1]
    test_target = jax.random.randint(k5, (B, 1), 1, NT + 1)

    loss, emission = few_shot_text_classifier(
        test_reps, test_output_mask, support_reps, support_output_mask,
        test_target, support_target)
    jax.block_until_ready((loss, emission))

    ref_loss, ref_emission = _reference(
        test_reps, support_reps, support_output_mask, support_target,
        test_target)
    # Kernel reassociates the contractions (mask/count folded on the host),
    # so allow a small fp tolerance.
    assert jnp.allclose(emission, ref_emission, rtol=1e-3, atol=1e-3), (
        emission, ref_emission)
    assert jnp.allclose(loss, ref_loss, rtol=1e-3, atol=1e-3), (loss, ref_loss)

    print("KERNEL_OK")
</pallas_src>

<mosaic_0001>
module attributes {stable_mosaic.version = 11 : i64} {
  func.func @_few_shot_kernel(%arg0: i32, %arg1: memref<1x1x128xf32, #tpu.memory_space<vmem>>, %arg2: memref<1x32x128xf32, #tpu.memory_space<vmem>>, %arg3: memref<1x32x4xf32, #tpu.memory_space<vmem>>, %arg4: memref<1x4x128xf32, #tpu.memory_space<vmem>>, %arg5: memref<1x1x128xf32, #tpu.memory_space<vmem>>, %arg6: memref<1x1x128xf32, #tpu.memory_space<vmem>>) attributes {dimension_semantics = [#tpu.dimension_semantics<parallel>], iteration_bounds = array<i64: 2>, scalar_prefetch = 0 : i64, scratch_operands = 0 : i64, tpu.core_type = #tpu.core_type<tc>, window_params = [{transform_indices = @transform_0, window_bounds = array<i64: 1, 1, 128>}, {transform_indices = @transform_1, window_bounds = array<i64: 1, 32, 128>}, {transform_indices = @transform_2, window_bounds = array<i64: 1, 32, 4>}, {transform_indices = @transform_3, window_bounds = array<i64: 1, 4, 128>}, {transform_indices = @transform_4, window_bounds = array<i64: 1, 1, 128>}, {transform_indices = @transform_5, window_bounds = array<i64: 1, 1, 128>}]} {
    %c0 = arith.constant 0 : index
    %c0_0 = arith.constant 0 : index
    %c0_1 = arith.constant 0 : index
    %0 = vector.load %arg1[%c0, %c0_0, %c0_1] : memref<1x1x128xf32, #tpu.memory_space<vmem>>, vector<1x1x128xf32>
    %c0_2 = arith.constant 0 : index
    %c0_3 = arith.constant 0 : index
    %c0_4 = arith.constant 0 : index
    %1 = vector.load %arg2[%c0_2, %c0_3, %c0_4] : memref<1x32x128xf32, #tpu.memory_space<vmem>>, vector<1x32x128xf32>
    "tpu.trace_start"() <{level = 10 : i32, message = "bqd,bnd->bqn"}> : () -> ()
    %cst = arith.constant dense<0.000000e+00> : vector<1x1x32xf32>
    %2 = tpu.matmul %0, %1, %cst {dimension_numbers = #tpu.dot_dimension_numbers<[2], [2], [1], [1], [0, 0, 0, 1, 1, 1], [0], [0]>} : vector<1x1x128xf32>, vector<1x32x128xf32>, vector<1x1x32xf32> -> vector<1x1x32xf32>
    "tpu.trace_stop"() : () -> ()
    %c0_5 = arith.constant 0 : index
    %c0_6 = arith.constant 0 : index
    %c0_7 = arith.constant 0 : index
    %3 = vector.load %arg3[%c0_5, %c0_6, %c0_7] : memref<1x32x4xf32, #tpu.memory_space<vmem>>, vector<1x32x4xf32>
    "tpu.trace_start"() <{level = 10 : i32, message = "bqn,bns->bqs"}> : () -> ()
    %cst_8 = arith.constant dense<0.000000e+00> : vector<1x1x4xf32>
    %4 = tpu.matmul %2, %3, %cst_8 {dimension_numbers = #tpu.dot_dimension_numbers<[2], [1], [1], [2], [0, 0, 0, 1, 1, 2], [0], [0]>} : vector<1x1x32xf32>, vector<1x32x4xf32>, vector<1x1x4xf32> -> vector<1x1x4xf32>
    "tpu.trace_stop"() : () -> ()
    %c0_9 = arith.constant 0 : index
    %c0_10 = arith.constant 0 : index
    %c0_11 = arith.constant 0 : index
    %5 = vector.load %arg4[%c0_9, %c0_10, %c0_11] : memref<1x4x128xf32, #tpu.memory_space<vmem>>, vector<1x4x128xf32>
    "tpu.trace_start"() <{level = 10 : i32, message = "bqs,bst->bqt"}> : () -> ()
    %cst_12 = arith.constant dense<0.000000e+00> : vector<1x1x128xf32>
    %6 = tpu.matmul %4, %5, %cst_12 {dimension_numbers = #tpu.dot_dimension_numbers<[2], [1], [1], [2], [0, 0, 0, 1, 1, 2], [0], [0]>} : vector<1x1x4xf32>, vector<1x4x128xf32>, vector<1x1x128xf32> -> vector<1x1x128xf32>
    "tpu.trace_stop"() : () -> ()
    %7 = tpu.iota {dimensions = array<i32: 2>} : vector<1x1x128xi32>
    %c8_i32 = arith.constant 8 : i32
    %8 = vector.broadcast %c8_i32 : i32 to vector<1x1x128xi32>
    %9 = arith.cmpi slt, %7, %8 : vector<1x1x128xi32>
    %cst_13 = arith.constant 0xFF800000 : f32
    %10 = vector.broadcast %cst_13 : f32 to vector<1x1x128xf32>
    %11 = arith.select %9, %6, %10 : vector<1x1x128xi1>, vector<1x1x128xf32>
    %cst_14 = arith.constant dense<0xFF800000> : vector<1x1xf32>
    %12 = vector.multi_reduction <maximumf>, %11, %cst_14 [2] : vector<1x1x128xf32> to vector<1x1xf32>
    %13 = vector.shape_cast %12 : vector<1x1xf32> to vector<1x1x1xf32>
    %14 = vector.broadcast %13 : vector<1x1x1xf32> to vector<1x1x128xf32>
    %15 = arith.subf %11, %14 : vector<1x1x128xf32>
    %16 = math.exp %15 : vector<1x1x128xf32>
    %cst_15 = arith.constant dense<0.000000e+00> : vector<1x1xf32>
    %17 = vector.multi_reduction <add>, %16, %cst_15 [2] : vector<1x1x128xf32> to vector<1x1xf32>
    %18 = vector.shape_cast %17 : vector<1x1xf32> to vector<1x1x1xf32>
    %19 = math.log %18 : vector<1x1x1xf32>
    %20 = arith.addf %13, %19 : vector<1x1x1xf32>
    %c0_16 = arith.constant 0 : index
    %c0_17 = arith.constant 0 : index
    %c0_18 = arith.constant 0 : index
    %21 = vector.load %arg5[%c0_16, %c0_17, %c0_18] : memref<1x1x128xf32, #tpu.memory_space<vmem>>, vector<1x1x128xf32>
    %22 = arith.mulf %6, %21 : vector<1x1x128xf32>
    %cst_19 = arith.constant dense<0.000000e+00> : vector<1x1xf32>
    %23 = vector.multi_reduction <add>, %22, %cst_19 [2] : vector<1x1x128xf32> to vector<1x1xf32>
    %24 = vector.shape_cast %23 : vector<1x1xf32> to vector<1x1x1xf32>
    %25 = arith.subf %20, %24 : vector<1x1x1xf32>
    %26 = vector.shape_cast %25 : vector<1x1x1xf32> to vector<1x1x1xf32>
    %27 = vector.broadcast %26 : vector<1x1x1xf32> to vector<1x1x128xf32>
    %c8_i32_20 = arith.constant 8 : i32
    %28 = vector.broadcast %c8_i32_20 : i32 to vector<1x1x128xi32>
    %29 = arith.cmpi eq, %7, %28 : vector<1x1x128xi32>
    %30 = arith.select %29, %27, %6 : vector<1x1x128xi1>, vector<1x1x128xf32>
    %c0_21 = arith.constant 0 : index
    %c0_22 = arith.constant 0 : index
    %c0_23 = arith.constant 0 : index
    %31 = vector.load %arg6[%c0_21, %c0_22, %c0_23] : memref<1x1x128xf32, #tpu.memory_space<vmem>>, vector<1x1x128xf32>
    tpu.vector_store %arg6[%c0_21, %c0_22, %c0_23], %30 {strides = array<i32>} : memref<1x1x128xf32, #tpu.memory_space<vmem>>, vector<1x1x128xf32>,
    return
  }
  func.func @transform_0(%arg0: i32) -> (i32, i32, i32) {
    %c0_i32 = arith.constant 0 : i32
    %c0_i32_0 = arith.constant 0 : i32
    %c0_i32_1 = arith.constant 0 : i32
    return %arg0, %c0_i32, %c0_i32_0 : i32, i32, i32
  }
  func.func @transform_1(%arg0: i32) -> (i32, i32, i32) {
    %c0_i32 = arith.constant 0 : i32
    %c0_i32_0 = arith.constant 0 : i32
    %c0_i32_1 = arith.constant 0 : i32
    return %arg0, %c0_i32, %c0_i32_0 : i32, i32, i32
  }
  func.func @transform_2(%arg0: i32) -> (i32, i32, i32) {
    %c0_i32 = arith.constant 0 : i32
    %c0_i32_0 = arith.constant 0 : i32
    %c0_i32_1 = arith.constant 0 : i32
    return %arg0, %c0_i32, %c0_i32_0 : i32, i32, i32
  }
  func.func @transform_3(%arg0: i32) -> (i32, i32, i32) {
    %c0_i32 = arith.constant 0 : i32
    %c0_i32_0 = arith.constant 0 : i32
    %c0_i32_1 = arith.constant 0 : i32
    return %arg0, %c0_i32, %c0_i32_0 : i32, i32, i32
  }
  func.func @transform_4(%arg0: i32) -> (i32, i32, i32) {
    %c0_i32 = arith.constant 0 : i32
    %c0_i32_0 = arith.constant 0 : i32
    %c0_i32_1 = arith.constant 0 : i32
    return %arg0, %c0_i32, %c0_i32_0 : i32, i32, i32
  }
  func.func @transform_5(%arg0: i32) -> (i32, i32, i32) {
    %c0_i32 = arith.constant 0 : i32
    %c0_i32_0 = arith.constant 0 : i32
    %c0_i32_1 = arith.constant 0 : i32
    return %arg0, %c0_i32, %c0_i32_0 : i32, i32, i32
  }
}

</mosaic_0001>

<llo_original>
// kernel: tpu_custom_call.1
$region0: #{tpu_custom_call.1}
  #allocation0 [shape = 'u32[]', space=smem, size = 0x4, offset = 0x4, fixed_abs, tag = 'smem constant byte address 0x4 - core index']
  #allocation1 [shape = 'u32[144,128]{1,0:T(1,128)}', space=vmem, size = 0x12000, scoped, tag = 'internal scratch']
  %s0 = inlined_call_operand.vmem [shape: f32[2,1,128], index: 0, kind: input, shape index: {}]
  %s1 = inlined_call_operand.vmem [shape: f32[2,32,128], index: 1, kind: input, shape index: {}]
  %s2 = inlined_call_operand.vmem [shape: f32[2,32,4], index: 2, kind: input, shape index: {}]
  %s3 = inlined_call_operand.vmem [shape: f32[2,4,128], index: 3, kind: input, shape index: {}]
  %s4 = inlined_call_operand.vmem [shape: f32[2,1,128], index: 4, kind: input, shape index: {}]
  %s5 = inlined_call_operand.hbm [shape: f32[2,1,128], index: 5, kind: output, shape index: {}]
  %s6 = sld [smem:[#allocation0]]
  $region53: #{tpu_custom_call.1} parent=0
    _
  %s8 = ssub.s32 1, %s6
  %s9 = scalar_select 0, %s8, %s6
  $region1: #{tpu_custom_call.1} parent=0
    #allocation2 [shape = 'u8[1024]{0}', space=vmem, size = 0x400, scoped, tag = 'output window, operand 0']
    #allocation3 [shape = 's32[2]{0}', space=sflag, size = 0x8, scoped, tag = 'scoped memory for tpu_custom_call.1']
    %10 = vsyncpa [#allocation3], 0
    %s11 = scalar_lea.sflag [#allocation3], 1
    %12 = vsyncpa %s11, 0
    loop: start=0, step=1, limit=4
    $region2: #{tpu_custom_call.1} parent=1 // loop_pre_header
      _
    $region3: #{tpu_custom_call.1} parent=1 // loop_header
      %s14 = sphi 0, %s18
      %p15 = scmp.ge.s32.totalorder %s14, 4
      %s24 = sphi 0, %s26
      %s27 = sphi 0, %s24
      %s28 = sphi 0, %s27
      %s44 = sphi 0, %s28
      %s50 = sphi 0, %s52
      %s53 = sphi 0, %s50
      %s54 = sphi 0, %s53
      %s70 = sphi 0, %s54
      %s76 = sphi 0, %s78
      %s79 = sphi 0, %s76
      %s80 = sphi 0, %s79
      %s96 = sphi 0, %s80
      %s102 = sphi 0, %s104
      %s105 = sphi 0, %s102
      %s106 = sphi 0, %s105
      %s122 = sphi 0, %s106
      %s128 = sphi 0, %s130
      %s131 = sphi 0, %s128
      %s132 = sphi 0, %s131
      %s148 = sphi 0, %s132
      %s154 = sphi 0, %s156
      %s157 = sphi 0, %s154
      %s158 = sphi 0, %s157
      %s174 = sphi 0, %s158
    $region4: #{tpu_custom_call.1} parent=1 // loop_header_branch
      %17 = sbr.rel (%p15) target = $region8
    $region5: #{tpu_custom_call.1} parent=1 // loop_body
      %s19 = ssub.s32 %s14, 1
      %s20 = ssub.s32 %s14, 2
      %s21 = sadd.s32 %s14, 1
      %s22 = ssub.s32 %s14, %s21
      %p23 = scmp.eq.s32.totalorder %s22, 0
      %s25 = sadd.s32 %s24, 1
      %s26 = scalar_select %p23, %s24, %s25
      %p29 = pneg %p23
      %p30 = scmp.eq.s32.totalorder %s14, 1
      %p31 = por %p29, %p30
      %p32 = scmp.ne.s32.totalorder %s24, %s27
      %p33 = scmp.eq.s32.totalorder %s14, 0
      %p34 = por %p32, %p33
      %p35 = scmp.ne.s32.totalorder %s24, %s27
      %p36 = scmp.eq.s32.totalorder %s19, 1
      %p37 = por %p35, %p36
      %p38 = scmp.ne.s32.totalorder %s27, %s28
      %p39 = scmp.eq.s32.totalorder %s19, 0
      %p40 = por %p38, %p39
      %p41 = scmp.ne.s32.totalorder %s27, %s28
      %p42 = scmp.eq.s32.totalorder %s20, 1
      %p43 = por %p41, %p42
      %p45 = scmp.ne.s32.totalorder %s28, %s44
      %p46 = scmp.eq.s32.totalorder %s20, 0
      %p47 = por %p45, %p46
      %s48 = ssub.s32 %s14, %s21
      %p49 = scmp.eq.s32.totalorder %s48, 0
      %s51 = sadd.s32 %s50, 1
      %s52 = scalar_select %p49, %s50, %s51
      %p55 = pneg %p49
      %p56 = scmp.eq.s32.totalorder %s14, 1
      %p57 = por %p55, %p56
      %p58 = scmp.ne.s32.totalorder %s50, %s53
      %p59 = scmp.eq.s32.totalorder %s14, 0
      %p60 = por %p58, %p59
      %p61 = scmp.ne.s32.totalorder %s50, %s53
      %p62 = scmp.eq.s32.totalorder %s19, 1
      %p63 = por %p61, %p62
      %p64 = scmp.ne.s32.totalorder %s53, %s54
      %p65 = scmp.eq.s32.totalorder %s19, 0
      %p66 = por %p64, %p65
      %p67 = scmp.ne.s32.totalorder %s53, %s54
      %p68 = scmp.eq.s32.totalorder %s20, 1
      %p69 = por %p67, %p68
      %p71 = scmp.ne.s32.totalorder %s54, %s70
      %p72 = scmp.eq.s32.totalorder %s20, 0
      %p73 = por %p71, %p72
      %s74 = ssub.s32 %s14, %s21
      %p75 = scmp.eq.s32.totalorder %s74, 0
      %s77 = sadd.s32 %s76, 1
      %s78 = scalar_select %p75, %s76, %s77
      %p81 = pneg %p75
      %p82 = scmp.eq.s32.totalorder %s14, 1
      %p83 = por %p81, %p82
      %p84 = scmp.ne.s32.totalorder %s76, %s79
      %p85 = scmp.eq.s32.totalorder %s14, 0
      %p86 = por %p84, %p85
      %p87 = scmp.ne.s32.totalorder %s76, %s79
      %p88 = scmp.eq.s32.totalorder %s19, 1
      %p89 = por %p87, %p88
      %p90 = scmp.ne.s32.totalorder %s79, %s80
      %p91 = scmp.eq.s32.totalorder %s19, 0
      %p92 = por %p90, %p91
      %p93 = scmp.ne.s32.totalorder %s79, %s80
      %p94 = scmp.eq.s32.totalorder %s20, 1
      %p95 = por %p93, %p94
      %p97 = scmp.ne.s32.totalorder %s80, %s96
      %p98 = scmp.eq.s32.totalorder %s20, 0
      %p99 = por %p97, %p98
      %s100 = ssub.s32 %s14, %s21
      %p101 = scmp.eq.s32.totalorder %s100, 0
      %s103 = sadd.s32 %s102, 1
      %s104 = scalar_select %p101, %s102, %s103
      %p107 = pneg %p101
      %p108 = scmp.eq.s32.totalorder %s14, 1
      %p109 = por %p107, %p108
      %p110 = scmp.ne.s32.totalorder %s102, %s105
      %p111 = scmp.eq.s32.totalorder %s14, 0
      %p112 = por %p110, %p111
      %p113 = scmp.ne.s32.totalorder %s102, %s105
      %p114 = scmp.eq.s32.totalorder %s19, 1
      %p115 = por %p113, %p114
      %p116 = scmp.ne.s32.totalorder %s105, %s106
      %p117 = scmp.eq.s32.totalorder %s19, 0
      %p118 = por %p116, %p117
      %p119 = scmp.ne.s32.totalorder %s105, %s106
      %p120 = scmp.eq.s32.totalorder %s20, 1
      %p121 = por %p119, %p120
      %p123 = scmp.ne.s32.totalorder %s106, %s122
      %p124 = scmp.eq.s32.totalorder %s20, 0
      %p125 = por %p123, %p124
      %s126 = ssub.s32 %s14, %s21
      %p127 = scmp.eq.s32.totalorder %s126, 0
      %s129 = sadd.s32 %s128, 1
      %s130 = scalar_select %p127, %s128, %s129
      %p133 = pneg %p127
      %p134 = scmp.eq.s32.totalorder %s14, 1
      %p135 = por %p133, %p134
      %p136 = scmp.ne.s32.totalorder %s128, %s131
      %p137 = scmp.eq.s32.totalorder %s14, 0
      %p138 = por %p136, %p137
      %p139 = scmp.ne.s32.totalorder %s128, %s131
      %p140 = scmp.eq.s32.totalorder %s19, 1
      %p141 = por %p139, %p140
      %p142 = scmp.ne.s32.totalorder %s131, %s132
      %p143 = scmp.eq.s32.totalorder %s19, 0
      %p144 = por %p142, %p143
      %p145 = scmp.ne.s32.totalorder %s131, %s132
      %p146 = scmp.eq.s32.totalorder %s20, 1
      %p147 = por %p145, %p146
      %p149 = scmp.ne.s32.totalorder %s132, %s148
      %p150 = scmp.eq.s32.totalorder %s20, 0
      %p151 = por %p149, %p150
      %s152 = ssub.s32 %s14, %s21
      %p153 = scmp.eq.s32.totalorder %s152, 0
      %s155 = sadd.s32 %s154, 1
      %s156 = scalar_select %p153, %s154, %s155
      %p159 = pneg %p153
      %p160 = scmp.eq.s32.totalorder %s14, 1
      %p161 = por %p159, %p160
      %p162 = scmp.ne.s32.totalorder %s154, %s157
      %p163 = scmp.eq.s32.totalorder %s14, 0
      %p164 = por %p162, %p163
      %p165 = scmp.ne.s32.totalorder %s154, %s157
      %p166 = scmp.eq.s32.totalorder %s19, 1
      %p167 = por %p165, %p166
      %p168 = scmp.ne.s32.totalorder %s157, %s158
      %p169 = scmp.eq.s32.totalorder %s19, 0
      %p170 = por %p168, %p169
      %p171 = scmp.ne.s32.totalorder %s157, %s158
      %p172 = scmp.eq.s32.totalorder %s20, 1
      %p173 = por %p171, %p172
      %p175 = scmp.ne.s32.totalorder %s158, %s174
      %p176 = scmp.eq.s32.totalorder %s20, 0
      %p177 = por %p175, %p176
      %p178 = scmp.le.s32.totalorder 1, %s14
      %p179 = scmp.lt.s32.totalorder %s14, 3
      %p180 = pnand %p178, %p179
      %p181 = pneg %p180
      // Predicated region
      $region9: #{tpu_custom_call.1} parent=5 // pred_check
        _
      $region10: #{tpu_custom_call.1} parent=5 // pred_check_branch
        %183 = sbr.rel (%p180) target = $region12
      $region11: #{tpu_custom_call.1} parent=5 // pred_region
        %s184 = ssub.s32 %s14, 1
      $region12: #{tpu_custom_call.1} parent=5 // pred_fallthru
        _
      %p185 = scmp.lt.s32.totalorder %s14, 2
      // Predicated region
      $region13: #{tpu_custom_call.1} parent=5 // pred_check
        %p186 = pneg %p185
      $region14: #{tpu_custom_call.1} parent=5 // pred_check_branch
        %188 = sbr.rel (%p186) target = $region16
      $region15: #{tpu_custom_call.1} parent=5 // pred_region
        // Predicated region
        $region17: #{tpu_custom_call.1} parent=15 // pred_check
          %p189 = pneg %p34
        $region18: #{tpu_custom_call.1} parent=15 // pred_check_branch
          %191 = sbr.rel (%p189) target = $region20
        $region19: #{tpu_custom_call.1} parent=15 // pred_region
          %p192 = scmp.lt.s32.totalorder %s14, 1
          %s193 = scalar_select %p192, %s14, 1
          %s194 = scalar_lea.vmem %s0, %s193
        $region20: #{tpu_custom_call.1} parent=15 // pred_fallthru
          _
        // Predicated region
        $region21: #{tpu_custom_call.1} parent=15 // pred_check
          %p195 = pneg %p60
        $region22: #{tpu_custom_call.1} parent=15 // pred_check_branch
          %197 = sbr.rel (%p195) target = $region24
        $region23: #{tpu_custom_call.1} parent=15 // pred_region
          %p198 = scmp.lt.s32.totalorder %s14, 1
          %s199 = scalar_select %p198, %s14, 1
          %s200 = smul.addr %s199, 4
          %s201 = smul.addr %s200, 8
          %s202 = scalar_lea.vmem %s1, %s201
        $region24: #{tpu_custom_call.1} parent=15 // pred_fallthru
          _
        // Predicated region
        $region25: #{tpu_custom_call.1} parent=15 // pred_check
          %p203 = pneg %p86
        $region26: #{tpu_custom_call.1} parent=15 // pred_check_branch
          %205 = sbr.rel (%p203) target = $region28
        $region27: #{tpu_custom_call.1} parent=15 // pred_region
          %p206 = scmp.lt.s32.totalorder %s14, 1
          %s207 = scalar_select %p206, %s14, 1
          %s208 = smul.addr %s207, 4
          %s209 = smul.addr %s208, 8
          %s210 = scalar_lea.vmem %s2, %s209
        $region28: #{tpu_custom_call.1} parent=15 // pred_fallthru
          _
        // Predicated region
        $region29: #{tpu_custom_call.1} parent=15 // pred_check
          %p211 = pneg %p112
        $region30: #{tpu_custom_call.1} parent=15 // pred_check_branch
          %213 = sbr.rel (%p211) target = $region32
        $region31: #{tpu_custom_call.1} parent=15 // pred_region
          %p214 = scmp.lt.s32.totalorder %s14, 1
          %s215 = scalar_select %p214, %s14, 1
          %s216 = smul.addr %s215, 4
          %s217 = scalar_lea.vmem %s3, %s216
        $region32: #{tpu_custom_call.1} parent=15 // pred_fallthru
          _
        // Predicated region
        $region33: #{tpu_custom_call.1} parent=15 // pred_check
          %p218 = pneg %p138
        $region34: #{tpu_custom_call.1} parent=15 // pred_check_branch
          %220 = sbr.rel (%p218) target = $region36
        $region35: #{tpu_custom_call.1} parent=15 // pred_region
          %p221 = scmp.lt.s32.totalorder %s14, 1
          %s222 = scalar_select %p221, %s14, 1
          %s223 = scalar_lea.vmem %s4, %s222
        $region36: #{tpu_custom_call.1} parent=15 // pred_fallthru
          _
      $region16: #{tpu_custom_call.1} parent=5 // pred_fallthru
        _
      %p224 = scmp.le.s32.totalorder 1, %s14
      %p225 = scmp.lt.s32.totalorder %s14, 3
      %p226 = pnand %p224, %p225
      %p227 = pneg %p226
      // Predicated region
      $region37: #{tpu_custom_call.1} parent=5 // pred_check
        _
      $region38: #{tpu_custom_call.1} parent=5 // pred_check_branch
        %229 = sbr.rel (%p226) target = $region40
      $region39: #{tpu_custom_call.1} parent=5 // pred_region
        %s230 = ssub.s32 %s14, 1
        %p231 = scmp.lt.s32.totalorder %s19, 1
        %s232 = scalar_select %p231, %s19, 1
        %s233 = scalar_lea.vmem %s0, %s232
        %p234 = pneg %p40
        %p235 = pneg %p37
        %p236 = scmp.lt.s32.totalorder %s19, 1
        %s237 = scalar_select %p236, %s19, 1
        %s238 = smul.addr %s237, 4
        %s239 = smul.addr %s238, 8
        %s240 = scalar_lea.vmem %s1, %s239
        %p241 = pneg %p66
        %p242 = pneg %p63
        %p243 = scmp.lt.s32.totalorder %s19, 1
        %s244 = scalar_select %p243, %s19, 1
        %s245 = smul.addr %s244, 4
        %s246 = smul.addr %s245, 8
        %s247 = scalar_lea.vmem %s2, %s246
        %p248 = pneg %p92
        %p249 = pneg %p89
        %p250 = scmp.lt.s32.totalorder %s19, 1
        %s251 = scalar_select %p250, %s19, 1
        %s252 = smul.addr %s251, 4
        %s253 = scalar_lea.vmem %s3, %s252
        %p254 = pneg %p118
        %p255 = pneg %p115
        %p256 = scmp.lt.s32.totalorder %s19, 1
        %s257 = scalar_select %p256, %s19, 1
        %s258 = scalar_lea.vmem %s4, %s257
        %p259 = pneg %p144
        %p260 = pneg %p141
        %p261 = pneg %p170
        %p262 = pneg %p167
        %s263 = sand.u32 %s157, 1
        %s264 = scalar_lea.sflag [#allocation3], %s263
        %s265 = sand.u32 %s157, 1
        %s266 = scalar_lea.vmem [#allocation2], %s265
        %p267 = scmp.lt.s32.totalorder %s19, 1
        %s268 = scalar_select %p267, %s19, 1
        %s269 = scalar_lea.vmem %s0, %s268
        %p270 = scmp.lt.s32.totalorder %s19, 1
        %s271 = scalar_select %p270, %s19, 1
        %s272 = smul.addr %s271, 4
        %s273 = smul.addr %s272, 8
        %s274 = scalar_lea.vmem %s1, %s273
        %p275 = scmp.lt.s32.totalorder %s19, 1
        %s276 = scalar_select %p275, %s19, 1
        %s277 = smul.addr %s276, 4
        %s278 = smul.addr %s277, 8
        %s279 = scalar_lea.vmem %s2, %s278
        %p280 = scmp.lt.s32.totalorder %s19, 1
        %s281 = scalar_select %p280, %s19, 1
        %s282 = smul.addr %s281, 4
        %s283 = scalar_lea.vmem %s3, %s282
        %p284 = scmp.lt.s32.totalorder %s19, 1
        %s285 = scalar_select %p284, %s19, 1
        %s286 = scalar_lea.vmem %s4, %s285
        %v287 = vld [vmem:[%s269] sm:$0x1]
        %v288 = vld [vmem:[%s274] sm:$0xff]
        %v289 = vld [vmem:[%s274 + $0x8] sm:$0xff]
        %v290 = vld [vmem:[%s274 + $0x10] sm:$0xff]
        %v291 = vld [vmem:[%s274 + $0x18] sm:$0xff]
        %292 = vmatprep.subr.mxu0 0.0
        %293 = vmatpush1.xpose.msra.mxu0 %v288
        %294 = vmatprep.subr.mxu0 0.0
        %295 = vmatpush1.xpose.msra.mxu0 %v289
        %296 = vmatprep.subr.mxu0 0.0
        %297 = vmatpush1.xpose.msra.mxu0 %v290
        %298 = vmatprep.subr.mxu0 0.0
        %299 = vmatpush1.xpose.msra.mxu0 %v291
        %300 = vmatprep.subr.mxu0 0.0
        %301 = vmatpush1.xpose.msra.mxu0 0.0
        %302 = vmatprep.subr.mxu0 0.0
        %303 = vmatpush1.xpose.msra.mxu0 0.0
        %304 = vmatprep.subr.mxu0 0.0
        %305 = vmatpush1.xpose.msra.mxu0 0.0
        %306 = vmatprep.subr.mxu0 0.0
        %307 = vmatpush1.xpose.msra.mxu0 0.0
        %308 = vmatprep.subr.mxu0 0.0
        %309 = vmatpush1.xpose.msra.mxu0 0.0
        %310 = vmatprep.subr.mxu0 0.0
        %311 = vmatpush1.xpose.msra.mxu0 0.0
        %312 = vmatprep.subr.mxu0 0.0
        %313 = vmatpush1.xpose.msra.mxu0 0.0
        %314 = vmatprep.subr.mxu0 0.0
        %315 = vmatpush1.xpose.msra.mxu0 0.0
        %316 = vmatprep.subr.mxu0 0.0
        %317 = vmatpush1.xpose.msra.mxu0 0.0
        %318 = vmatprep.subr.mxu0 0.0
        %319 = vmatpush1.xpose.msra.mxu0 0.0
        %320 = vmatprep.subr.mxu0 0.0
        %321 = vmatpush1.xpose.msra.mxu0 0.0
        %322 = vmatprep.subr.mxu0 0.0
        %323 = vmatpush1.xpose.msra.mxu0 0.0
        %324 = vmatprep.subr.mxu0 0.0
        %325 = vmatpush1.xpose.msra.mxu0 0.0
        %326 = vmatprep.subr.mxu0 0.0
        %327 = vmatpush1.xpose.msra.mxu0 0.0
        %328 = vmatprep.subr.mxu0 0.0
        %329 = vmatpush1.xpose.msra.mxu0 0.0
        %330 = vmatprep.subr.mxu0 0.0
        %331 = vmatpush1.xpose.msra.mxu0 0.0
        %332 = vmatprep.subr.mxu0 0.0
        %333 = vmatpush1.xpose.msra.mxu0 0.0
        %334 = vmatprep.subr.mxu0 0.0
        %335 = vmatpush1.xpose.msra.mxu0 0.0
        %336 = vmatprep.subr.mxu0 0.0
        %337 = vmatpush1.xpose.msra.mxu0 0.0
        %338 = vmatprep.subr.mxu0 0.0
        %339 = vmatpush1.xpose.msra.mxu0 0.0
        %340 = vmatprep.subr.mxu0 0.0
        %341 = vmatpush1.xpose.msra.mxu0 0.0
        %342 = vmatprep.subr.mxu0 0.0
        %343 = vmatpush1.xpose.msra.mxu0 0.0
        %344 = vmatprep.subr.mxu0 0.0
        %345 = vmatpush1.xpose.msra.mxu0 0.0
        %346 = vmatprep.subr.mxu0 0.0
        %347 = vmatpush1.xpose.msra.mxu0 0.0
        %348 = vmatprep.subr.mxu0 0.0
        %349 = vmatpush1.xpose.msra.mxu0 0.0
        %350 = vmatprep.subr.mxu0 0.0
        %351 = vmatpush1.xpose.msra.mxu0 0.0
        %352 = vmatprep.subr.mxu0 0.0
        %353 = vmatpush1.xpose.msra.mxu0 0.0
        %354 = vmatprep.subr.mxu0 0.0
        %355 = vmatpush1.xpose.msra.mxu0 0.0
        %356 = vmatprep.mubr.f32.mxu0 0.0
        %357 = vmatmul.mubr.f32.gmra.mrb[0].mxu0 %v287
        %v358 = vpop.f32.mrb[0].mxu0
        %v359 = vadd.f32 0.0, %v358
        %v360 = vpop.f32.mrb[0].mxu0
        %361 = vdwg.mxu0
        %v362 = vld [vmem:[%s279] sm:$0xff]
        %v363 = vld [vmem:[%s279 + $0x8] sm:$0xff]
        %v364 = vld [vmem:[%s279 + $0x10] sm:$0xff]
        %v365 = vld [vmem:[%s279 + $0x18] sm:$0xff]
        %vm366 = vcmask 261120
        %v368 = vsel %vm366, %v359, 0
        %370 = vmatprep.subr.mxu0 0.0
        %371 = vmatpush1.msra.mxu0 %v362
        %372 = vmatprep.subr.mxu0 0.0
        %373 = vmatpush1.msra.mxu0 %v363
        %374 = vmatprep.subr.mxu0 0.0
        %375 = vmatpush1.msra.mxu0 %v364
        %376 = vmatprep.subr.mxu0 0.0
        %377 = vmatpush1.msra.mxu0 %v365
        %378 = vmatprep.subr.mxu0 0.0
        %379 = vmatpush1.msra.mxu0 0.0
        %380 = vmatprep.subr.mxu0 0.0
        %381 = vmatpush1.msra.mxu0 0.0
        %382 = vmatprep.subr.mxu0 0.0
        %383 = vmatpush1.msra.mxu0 0.0
        %384 = vmatprep.subr.mxu0 0.0
        %385 = vmatpush1.msra.mxu0 0.0
        %386 = vmatprep.subr.mxu0 0.0
        %387 = vmatpush1.msra.mxu0 0.0
        %388 = vmatprep.subr.mxu0 0.0
        %389 = vmatpush1.msra.mxu0 0.0
        %390 = vmatprep.subr.mxu0 0.0
        %391 = vmatpush1.msra.mxu0 0.0
        %392 = vmatprep.subr.mxu0 0.0
        %393 = vmatpush1.msra.mxu0 0.0
        %394 = vmatprep.subr.mxu0 0.0
        %395 = vmatpush1.msra.mxu0 0.0
        %396 = vmatprep.subr.mxu0 0.0
        %397 = vmatpush1.msra.mxu0 0.0
        %398 = vmatprep.subr.mxu0 0.0
        %399 = vmatpush1.msra.mxu0 0.0
        %400 = vmatprep.subr.mxu0 0.0
        %401 = vmatpush1.msra.mxu0 0.0
        %402 = vmatprep.subr.mxu0 0.0
        %403 = vmatpush1.msra.mxu0 0.0
        %404 = vmatprep.subr.mxu0 0.0
        %405 = vmatpush1.msra.mxu0 0.0
        %406 = vmatprep.subr.mxu0 0.0
        %407 = vmatpush1.msra.mxu0 0.0
        %408 = vmatprep.subr.mxu0 0.0
        %409 = vmatpush1.msra.mxu0 0.0
        %410 = vmatprep.subr.mxu0 0.0
        %411 = vmatpush1.msra.mxu0 0.0
        %412 = vmatprep.subr.mxu0 0.0
        %413 = vmatpush1.msra.mxu0 0.0
        %414 = vmatprep.subr.mxu0 0.0
        %415 = vmatpush1.msra.mxu0 0.0
        %416 = vmatprep.subr.mxu0 0.0
        %417 = vmatpush1.msra.mxu0 0.0
        %418 = vmatprep.subr.mxu0 0.0
        %419 = vmatpush1.msra.mxu0 0.0
        %420 = vmatprep.subr.mxu0 0.0
        %421 = vmatpush1.msra.mxu0 0.0
        %422 = vmatprep.subr.mxu0 0.0
        %423 = vmatpush1.msra.mxu0 0.0
        %424 = vmatprep.subr.mxu0 0.0
        %425 = vmatpush1.msra.mxu0 0.0
        %426 = vmatprep.subr.mxu0 0.0
        %427 = vmatpush1.msra.mxu0 0.0
        %428 = vmatprep.subr.mxu0 0.0
        %429 = vmatpush1.msra.mxu0 0.0
        %430 = vmatprep.subr.mxu0 0.0
        %431 = vmatpush1.msra.mxu0 0.0
        %432 = vmatprep.subr.mxu0 0.0
        %433 = vmatpush1.msra.mxu0 0.0
        %434 = vmatprep.mubr.f32.mxu0 0.0
        %435 = vmatmul.mubr.f32.gmra.mrb[0].mxu0 %v368
        %v436 = vpop.f32.mrb[0].mxu0
        %v437 = vadd.f32 0.0, %v436
        %v438 = vpop.f32.mrb[0].mxu0
        %439 = vdwg.mxu0
        %v440 = vld [vmem:[%s283] sm:$0xf]
        %vm441 = vcmask 31744
        %v443 = vsel %vm441, %v437, 0
        %vm445 = vcmask 1043456
        %v447 = vsel %vm445, %v440, 0
        %449 = vmatprep.subr.mxu0 0.0
        %450 = vmatpush1.msra.mxu0 %v447
        %451 = vmatprep.subr.mxu0 0.0
        %452 = vmatpush1.msra.mxu0 0.0
        %453 = vmatprep.subr.mxu0 0.0
        %454 = vmatpush1.msra.mxu0 0.0
        %455 = vmatprep.subr.mxu0 0.0
        %456 = vmatpush1.msra.mxu0 0.0
        %457 = vmatprep.subr.mxu0 0.0
        %458 = vmatpush1.msra.mxu0 0.0
        %459 = vmatprep.subr.mxu0 0.0
        %460 = vmatpush1.msra.mxu0 0.0
        %461 = vmatprep.subr.mxu0 0.0
        %462 = vmatpush1.msra.mxu0 0.0
        %463 = vmatprep.subr.mxu0 0.0
        %464 = vmatpush1.msra.mxu0 0.0
        %465 = vmatprep.subr.mxu0 0.0
        %466 = vmatpush1.msra.mxu0 0.0
        %467 = vmatprep.subr.mxu0 0.0
        %468 = vmatpush1.msra.mxu0 0.0
        %469 = vmatprep.subr.mxu0 0.0
        %470 = vmatpush1.msra.mxu0 0.0
        %471 = vmatprep.subr.mxu0 0.0
        %472 = vmatpush1.msra.mxu0 0.0
        %473 = vmatprep.subr.mxu0 0.0
        %474 = vmatpush1.msra.mxu0 0.0
        %475 = vmatprep.subr.mxu0 0.0
        %476 = vmatpush1.msra.mxu0 0.0
        %477 = vmatprep.subr.mxu0 0.0
        %478 = vmatpush1.msra.mxu0 0.0
        %479 = vmatprep.subr.mxu0 0.0
        %480 = vmatpush1.msra.mxu0 0.0
        %481 = vmatprep.subr.mxu0 0.0
        %482 = vmatpush1.msra.mxu0 0.0
        %483 = vmatprep.subr.mxu0 0.0
        %484 = vmatpush1.msra.mxu0 0.0
        %485 = vmatprep.subr.mxu0 0.0
        %486 = vmatpush1.msra.mxu0 0.0
        %487 = vmatprep.subr.mxu0 0.0
        %488 = vmatpush1.msra.mxu0 0.0
        %489 = vmatprep.subr.mxu0 0.0
        %490 = vmatpush1.msra.mxu0 0.0
        %491 = vmatprep.subr.mxu0 0.0
        %492 = vmatpush1.msra.mxu0 0.0
        %493 = vmatprep.subr.mxu0 0.0
        %494 = vmatpush1.msra.mxu0 0.0
        %495 = vmatprep.subr.mxu0 0.0
        %496 = vmatpush1.msra.mxu0 0.0
        %497 = vmatprep.subr.mxu0 0.0
        %498 = vmatpush1.msra.mxu0 0.0
        %499 = vmatprep.subr.mxu0 0.0
        %500 = vmatpush1.msra.mxu0 0.0
        %501 = vmatprep.subr.mxu0 0.0
        %502 = vmatpush1.msra.mxu0 0.0
        %503 = vmatprep.subr.mxu0 0.0
        %504 = vmatpush1.msra.mxu0 0.0
        %505 = vmatprep.subr.mxu0 0.0
        %506 = vmatpush1.msra.mxu0 0.0
        %507 = vmatprep.subr.mxu0 0.0
        %508 = vmatpush1.msra.mxu0 0.0
        %509 = vmatprep.subr.mxu0 0.0
        %510 = vmatpush1.msra.mxu0 0.0
        %511 = vmatprep.subr.mxu0 0.0
        %512 = vmatpush1.msra.mxu0 0.0
        %513 = vmatprep.mubr.f32.mxu0 0.0
        %514 = vmatmul.mubr.f32.gmra.mrb[0].mxu0 %v443
        %v515 = vpop.f32.mrb[0].mxu0
        %v516 = vadd.f32 0.0, %v515
        %v517 = vpop.f32.mrb[0].mxu0
        %518 = vdwg.mxu0
        %v519 = vlaneseq
        %v520 = vand.u32 %v519, 127
        %vm521 = vcmp.lt.s32.totalorder %v520, 8
        %v522 = vsel %vm521, %v516, -inf
        %vm523 = vcmask 1040384
        %v524 = vsel %vm523, %v522, -inf
        %525 = vmax.xlane.f32.xlu0 %v524
        %v526 = vpop.xlane.xlu0 %525
        %v527 = vsub.f32 %v522, %v526
        %v528 = vmul.f32 %v527, 1.442695
        %v529 = vpow.pop %v528
        %v530 = vsel %vm523, %v529, 0.0
        %531 = vadd.xlane.f32.xlu0 %v530
        %v532 = vpop.xlane.xlu0 %531
        %v533 = vlog2.pop %v532
        %v534 = vmul.f32 %v533, 0.6931472
        %v535 = vadd.f32 %v526, %v534
        %v536 = vld [vmem:[%s286] sm:$0x1]
        %v537 = vmul.f32 %v516, %v536
        %v538 = vsel %vm523, %v537, 0.0
        %539 = vadd.xlane.f32.xlu0 %v538
        %v540 = vpop.xlane.xlu0 %539
        %v541 = vsub.f32 %v535, %v540
        %vm542 = vcmp.eq.s32.totalorder %v520, 8
        %v543 = vsel %vm542, %v541, %v516
        %544 = vst [vmem:[%s266] sm:$0x1] %v543
        %s545 = sand.u32 %s157, 1
        %s546 = scalar_lea.sflag [#allocation3], %s545
        %s547 = sand.u32 %s157, 1
        %s548 = scalar_lea.vmem [#allocation2], %s547
        // Predicated region
        $region41: #{tpu_custom_call.1} parent=39 // pred_check
          %p549 = pneg %p167
        $region42: #{tpu_custom_call.1} parent=39 // pred_check_branch
          %551 = sbr.rel (%p549) target = $region44
        $region43: #{tpu_custom_call.1} parent=39 // pred_region
          %s553 = ssub.s32 16, 16
          %554 = vsyncadd %s546, %s553
          %s555 = smul.addr %s19, 16
          %s556 = scalar_lea.hbm %s5, %s555
          %s558 = sshll.u32 %s548, 4
          %s559 = int_to_ptr.vmem [resolvable:$true] %s558
          %561 = dma.vmem_to_hbm [thread:$0]  %s559, 16, %s556, %s546
        $region44: #{tpu_custom_call.1} parent=39 // pred_fallthru
          _
      $region40: #{tpu_custom_call.1} parent=5 // pred_fallthru
        _
      %p562 = scmp.le.s32.totalorder 2, %s14
      // Predicated region
      $region45: #{tpu_custom_call.1} parent=5 // pred_check
        %p563 = pneg %p562
      $region46: #{tpu_custom_call.1} parent=5 // pred_check_branch
        %565 = sbr.rel (%p563) target = $region48
      $region47: #{tpu_custom_call.1} parent=5 // pred_region
        %s566 = ssub.s32 %s14, 2
        // Predicated region
        $region49: #{tpu_custom_call.1} parent=47 // pred_check
          %p567 = pneg %p173
        $region50: #{tpu_custom_call.1} parent=47 // pred_check_branch
          %569 = sbr.rel (%p567) target = $region52
        $region51: #{tpu_custom_call.1} parent=47 // pred_region
          %s570 = sand.u32 %s158, 1
          %s571 = scalar_lea.sflag [#allocation3], %s570
          %s572 = sand.u32 %s158, 1
          %s573 = scalar_lea.vmem [#allocation2], %s572
          %574 = dma.done %s571, 16
        $region52: #{tpu_custom_call.1} parent=47 // pred_fallthru
          _
      $region48: #{tpu_custom_call.1} parent=5 // pred_fallthru
        _
    $region6: #{tpu_custom_call.1} parent=1 // loop_footer
      %s18 = sadd.s32 1, %s14
    $region7: #{tpu_custom_call.1} parent=1 // loop_footer_branch
      %13 = sbr.rel target = $region3
    $region8: #{tpu_custom_call.1} parent=1 // loop_exit
      _
    %575 = vsyncpa [#allocation3], 1
    %s576 = scalar_lea.sflag [#allocation3], 1
    %577 = vsyncpa %s576, 1

</llo_original>
